<compile_context>
chip_gen: v5e
topology: v5e:2x2
jax: 0.10.0
libtpu: 0.0.40
codegen_flags: <defaults>
</compile_context>

<pallas_src>
import math

import jax
import jax.numpy as jnp
from jax.experimental import pallas as pl
from jax.experimental.pallas import tpu as pltpu

_LANE = 128
_VMEM_BUDGET = 40 << 20  # headroom under v7x's 64 MiB physical VMEM per TC


def _round_up(x, m):
    return (x + m - 1) // m * m


def _vmem_bytes(tm, packdim, d1p, d2p):
    """Rough per-step VMEM footprint (pipeline double-buffers every operand)."""
    x_buf = 2 * tm * packdim * 4                                   # f32 input tiles
    w_buf = 2 * (packdim * d1p + d1p * d2p + d2p * _LANE) * 2      # bf16 weights
    b_buf = 2 * (d1p + d2p + _LANE) * 4                            # f32 biases
    o_buf = 2 * tm * _LANE * 2                                     # bf16 output tiles
    act = tm * (d1p + d2p) * 4                                     # f32 intermediates
    return x_buf + w_buf + b_buf + o_buf + act


def _disc_mlp_kernel(x_ref, w1_ref, b1_ref, w2_ref, b2_ref, w3_ref, b3_ref, o_ref):
    """Fused Discriminator MLP on one (tm, packdim) batch tile.

    x arrives in f32 (cast to bf16 here); weights are pre-padded bf16, biases
    f32; all matmuls accumulate in f32 on the MXU.
    """
    x = x_ref[...].astype(jnp.bfloat16)

    # ---- Layer 1: Linear(packdim, d1) + LeakyReLU(0.2) (+ Dropout eval-identity) ----
    h = jnp.dot(x, w1_ref[...], preferred_element_type=jnp.float32) + b1_ref[...]
    h = jnp.maximum(h, 0.2 * h)
    # TODO(synk): Dropout(0.5) is eval-mode identity here; training-mode stochastic mask not implemented.

    # ---- Layer 2: Linear(d1, d2) + LeakyReLU(0.2) (+ Dropout eval-identity) ----
    h = jnp.dot(h.astype(jnp.bfloat16), w2_ref[...],
                preferred_element_type=jnp.float32) + b2_ref[...]
    h = jnp.maximum(h, 0.2 * h)

    # ---- Final: Linear(d2, 1), zero-padded to 128 lanes for a dense store ----
    out = jnp.dot(h.astype(jnp.bfloat16), w3_ref[...],
                  preferred_element_type=jnp.float32) + b3_ref[...]
    o_ref[...] = out.astype(o_ref.dtype)


def prepare_discriminator_params(params):
    """One-time weight prep: transpose-layout (in,out) weights -> lane-padded bf16.

    Call once and reuse across forward calls (avoids a per-call HBM pass over
    the weights).  K of the first layer stays un-padded so x can be fed to the
    kernel directly without zero-padding.
    """
    w1, b1, w2, b2, w3, b3 = params  # w*: (in, out) f32, b*: (1, out) f32
    packdim, d1 = w1.shape
    d2 = w2.shape[1]
    d1p = _round_up(d1, _LANE)
    d2p = _round_up(d2, _LANE)

    w1p = jnp.zeros((packdim, d1p), jnp.bfloat16).at[:, :d1].set(w1.astype(jnp.bfloat16))
    b1p = jnp.zeros((1, d1p), jnp.float32).at[:, :d1].set(b1)
    w2p = jnp.zeros((d1p, d2p), jnp.bfloat16).at[:d1, :d2].set(w2.astype(jnp.bfloat16))
    b2p = jnp.zeros((1, d2p), jnp.float32).at[:, :d2].set(b2)
    w3p = jnp.zeros((d2p, _LANE), jnp.bfloat16).at[:d2, :1].set(w3.astype(jnp.bfloat16))
    b3p = jnp.zeros((1, _LANE), jnp.float32).at[:, :1].set(b3)
    return (w1p, b1p, w2p, b2p, w3p, b3p)


def discriminator_forward(x, prepared_params, pack, tile_m=1024):
    """Pallas equivalent of Discriminator.forward(input) (eval mode).

    `prepared_params` comes from prepare_discriminator_params().
    Returns f32 logits of shape (batch // pack, 1).
    """
    batch, input_dim = x.shape
    assert batch % pack == 0
    packdim = input_dim * pack
    n = batch // pack
    xp = x.reshape(n, packdim)  # view; stays f32 in HBM, cast to bf16 in-kernel

    w1p, b1p, w2p, b2p, w3p, b3p = prepared_params
    assert w1p.shape[0] == packdim
    d1p = w1p.shape[1]
    d2p = w2p.shape[1]

    # ---- batch tile size ----
    if n < 16:
        tm = n  # single block covering the whole (tiny) batch
    else:
        # Cap so the grid has >= 2 steps: on v7x both TensorCores get work.
        two_step_cap = _round_up(-(-n // 2), 8)
        tm = max(8, _round_up(min(int(tile_m), two_step_cap), 8))
        # Shrink until the double-buffered footprint fits the VMEM budget
        # (v7x: 64 MiB physical; v5e: raise the 16 MiB default scoped limit below).
        while tm > 8 and _vmem_bytes(tm, packdim, d1p, d2p) > _VMEM_BUDGET:
            tm = max(8, _round_up(tm // 2, 8))

    grid = (pl.cdiv(n, tm),)

    x_spec = pl.BlockSpec((tm, packdim), lambda i: (i, 0))
    w1_spec = pl.BlockSpec((packdim, d1p), lambda i: (0, 0))
    b1_spec = pl.BlockSpec((1, d1p), lambda i: (0, 0))
    w2_spec = pl.BlockSpec((d1p, d2p), lambda i: (0, 0))
    b2_spec = pl.BlockSpec((1, d2p), lambda i: (0, 0))
    w3_spec = pl.BlockSpec((d2p, _LANE), lambda i: (0, 0))
    b3_spec = pl.BlockSpec((1, _LANE), lambda i: (0, 0))
    out_spec = pl.BlockSpec((tm, _LANE), lambda i: (i, 0))

    flops = 2 * n * (packdim * d1p + d1p * d2p + d2p * _LANE)
    bytes_accessed = (
        xp.size * 4                                     # f32 input
        + (w1p.size + w2p.size + w3p.size) * 2          # bf16 weights
        + (b1p.size + b2p.size + b3p.size) * 4          # f32 biases
        + n * _LANE * 2                                 # bf16 output
    )

    vmem_limit = int(min(max(2 * _vmem_bytes(tm, packdim, d1p, d2p), 32 << 20), 64 << 20))

    out = pl.pallas_call(
        _disc_mlp_kernel,
        out_shape=jax.ShapeDtypeStruct((n, _LANE), jnp.bfloat16),
        grid=grid,
        in_specs=[x_spec, w1_spec, b1_spec, w2_spec, b2_spec, w3_spec, b3_spec],
        out_specs=out_spec,
        compiler_params=pltpu.CompilerParams(
            dimension_semantics=("parallel",),
            vmem_limit_bytes=vmem_limit),
        cost_estimate=pl.CostEstimate(
            flops=flops, transcendentals=0, bytes_accessed=bytes_accessed),
    )(xp, w1p, b1p, w2p, b2p, w3p, b3p)

    # Keep only the real output column; upcast the bf16 store back to f32.
    return out[:, :1].astype(jnp.float32)


def init_discriminator_params(key, input_dim, discriminator_dim, pack):
    """Deterministic torch.nn.Linear-style init: U(-1/sqrt(fan_in), 1/sqrt(fan_in)).

    Weights stored transposed to (in_features, out_features); biases (1, out).
    """
    dims_in = [input_dim * pack] + list(discriminator_dim)
    dims_out = list(discriminator_dim) + [1]
    params = []
    for d_in, d_out in zip(dims_in, dims_out):
        key, kw, kb = jax.random.split(key, 3)
        bound = 1.0 / math.sqrt(d_in)
        w = jax.random.uniform(kw, (d_in, d_out), jnp.float32, -bound, bound)
        b = jax.random.uniform(kb, (1, d_out), jnp.float32, -bound, bound)
        params += [w, b]
    return tuple(params)


def reference_forward(x, params, pack):
    """Plain-JAX reference mirroring the kernel math (bf16 operands, f32 accumulate, bf16 output)."""
    batch, input_dim = x.shape
    xp = x.reshape(batch // pack, input_dim * pack)
    w1, b1, w2, b2, w3, b3 = params
    h = jnp.dot(xp.astype(jnp.bfloat16), w1.astype(jnp.bfloat16),
                preferred_element_type=jnp.float32) + b1
    h = jnp.maximum(h, 0.2 * h)
    h = jnp.dot(h.astype(jnp.bfloat16), w2.astype(jnp.bfloat16),
                preferred_element_type=jnp.float32) + b2
    h = jnp.maximum(h, 0.2 * h)
    logits = jnp.dot(h.astype(jnp.bfloat16), w3.astype(jnp.bfloat16),
                     preferred_element_type=jnp.float32) + b3
    return logits.astype(jnp.bfloat16).astype(jnp.float32)


if __name__ == "__main__":
    key = jax.random.PRNGKey(0)

    # Small shapes consistent with the module: Discriminator(input_dim=16,
    # discriminator_dim=(32, 32), pack=2) applied to a (batch=8, 16) input.
    input_dim = 16
    discriminator_dim = (32, 32)
    pack = 2
    batch = 8

    k_x, k_p = jax.random.split(key)
    x = jax.random.normal(k_x, (batch, input_dim), dtype=jnp.float32)
    params = init_discriminator_params(k_p, input_dim, discriminator_dim, pack)

    prepared = prepare_discriminator_params(params)   # one-time weight prep
    out = discriminator_forward(x, prepared, pack)
    out = jax.block_until_ready(out)

    ref = reference_forward(x, params, pack)
    assert out.shape == (batch // pack, 1), out.shape
    assert jnp.allclose(out, ref, atol=1e-2, rtol=1e-2), (out, ref)

    print("KERNEL_OK")
</pallas_src>

<mosaic_0001>
module attributes {stable_mosaic.version = 11 : i64} {
  func.func @_disc_mlp_kernel(%arg0: i32, %arg1: memref<4x32xf32, #tpu.memory_space<vmem>>, %arg2: memref<32x128xbf16, #tpu.memory_space<vmem>>, %arg3: memref<1x128xf32, #tpu.memory_space<vmem>>, %arg4: memref<128x128xbf16, #tpu.memory_space<vmem>>, %arg5: memref<1x128xf32, #tpu.memory_space<vmem>>, %arg6: memref<128x128xbf16, #tpu.memory_space<vmem>>, %arg7: memref<1x128xf32, #tpu.memory_space<vmem>>, %arg8: memref<4x128xbf16, #tpu.memory_space<vmem>>) attributes {dimension_semantics = [#tpu.dimension_semantics<parallel>], iteration_bounds = array<i64: 1>, scalar_prefetch = 0 : i64, scratch_operands = 0 : i64, tpu.core_type = #tpu.core_type<tc>, window_params = [{transform_indices = @transform_0, window_bounds = array<i64: 4, 32>}, {pipeline_mode = #tpu.pipeline_mode<synchronous>, transform_indices = @transform_1, window_bounds = array<i64: 32, 128>}, {pipeline_mode = #tpu.pipeline_mode<synchronous>, transform_indices = @transform_2, window_bounds = array<i64: 1, 128>}, {pipeline_mode = #tpu.pipeline_mode<synchronous>, transform_indices = @transform_3, window_bounds = array<i64: 128, 128>}, {pipeline_mode = #tpu.pipeline_mode<synchronous>, transform_indices = @transform_4, window_bounds = array<i64: 1, 128>}, {pipeline_mode = #tpu.pipeline_mode<synchronous>, transform_indices = @transform_5, window_bounds = array<i64: 128, 128>}, {pipeline_mode = #tpu.pipeline_mode<synchronous>, transform_indices = @transform_6, window_bounds = array<i64: 1, 128>}, {transform_indices = @transform_7, window_bounds = array<i64: 4, 128>}]} {
    %c0 = arith.constant 0 : index
    %c0_0 = arith.constant 0 : index
    %0 = vector.load %arg1[%c0, %c0_0] : memref<4x32xf32, #tpu.memory_space<vmem>>, vector<4x32xf32>
    %1 = arith.truncf %0 : vector<4x32xf32> to vector<4x32xbf16>
    %c0_1 = arith.constant 0 : index
    %c0_2 = arith.constant 0 : index
    %2 = vector.load %arg2[%c0_1, %c0_2] : memref<32x128xbf16, #tpu.memory_space<vmem>>, vector<32x128xbf16>
    %cst = arith.constant dense<0.000000e+00> : vector<4x128xf32>
    %3 = tpu.matmul %1, %2, %cst {dimension_numbers = #tpu.dot_dimension_numbers<[1], [0], [0], [1], [0, 0, 1, 1], [], []>} : vector<4x32xbf16>, vector<32x128xbf16>, vector<4x128xf32> -> vector<4x128xf32>
    %c0_3 = arith.constant 0 : index
    %c0_4 = arith.constant 0 : index
    %4 = vector.load %arg3[%c0_3, %c0_4] : memref<1x128xf32, #tpu.memory_space<vmem>>, vector<1x128xf32>
    %5 = vector.broadcast %4 : vector<1x128xf32> to vector<4x128xf32>
    %6 = arith.addf %3, %5 : vector<4x128xf32>
    %cst_5 = arith.constant 2.000000e-01 : f32
    %7 = vector.broadcast %cst_5 : f32 to vector<4x128xf32>
    %8 = arith.mulf %7, %6 : vector<4x128xf32>
    %9 = arith.maximumf %6, %8 : vector<4x128xf32>
    %10 = arith.truncf %9 : vector<4x128xf32> to vector<4x128xbf16>
    %c0_6 = arith.constant 0 : index
    %c0_7 = arith.constant 0 : index
    %11 = vector.load %arg4[%c0_6, %c0_7] : memref<128x128xbf16, #tpu.memory_space<vmem>>, vector<128x128xbf16>
    %cst_8 = arith.constant dense<0.000000e+00> : vector<4x128xf32>
    %12 = tpu.matmul %10, %11, %cst_8 {dimension_numbers = #tpu.dot_dimension_numbers<[1], [0], [0], [1], [0, 0, 1, 1], [], []>} : vector<4x128xbf16>, vector<128x128xbf16>, vector<4x128xf32> -> vector<4x128xf32>
    %c0_9 = arith.constant 0 : index
    %c0_10 = arith.constant 0 : index
    %13 = vector.load %arg5[%c0_9, %c0_10] : memref<1x128xf32, #tpu.memory_space<vmem>>, vector<1x128xf32>
    %14 = vector.broadcast %13 : vector<1x128xf32> to vector<4x128xf32>
    %15 = arith.addf %12, %14 : vector<4x128xf32>
    %cst_11 = arith.constant 2.000000e-01 : f32
    %16 = vector.broadcast %cst_11 : f32 to vector<4x128xf32>
    %17 = arith.mulf %16, %15 : vector<4x128xf32>
    %18 = arith.maximumf %15, %17 : vector<4x128xf32>
    %19 = arith.truncf %18 : vector<4x128xf32> to vector<4x128xbf16>
    %c0_12 = arith.constant 0 : index
    %c0_13 = arith.constant 0 : index
    %20 = vector.load %arg6[%c0_12, %c0_13] : memref<128x128xbf16, #tpu.memory_space<vmem>>, vector<128x128xbf16>
    %cst_14 = arith.constant dense<0.000000e+00> : vector<4x128xf32>
    %21 = tpu.matmul %19, %20, %cst_14 {dimension_numbers = #tpu.dot_dimension_numbers<[1], [0], [0], [1], [0, 0, 1, 1], [], []>} : vector<4x128xbf16>, vector<128x128xbf16>, vector<4x128xf32> -> vector<4x128xf32>
    %c0_15 = arith.constant 0 : index
    %c0_16 = arith.constant 0 : index
    %22 = vector.load %arg7[%c0_15, %c0_16] : memref<1x128xf32, #tpu.memory_space<vmem>>, vector<1x128xf32>
    %23 = vector.broadcast %22 : vector<1x128xf32> to vector<4x128xf32>
    %24 = arith.addf %21, %23 : vector<4x128xf32>
    %25 = arith.truncf %24 : vector<4x128xf32> to vector<4x128xbf16>
    %c0_17 = arith.constant 0 : index
    %c0_18 = arith.constant 0 : index
    %26 = vector.load %arg8[%c0_17, %c0_18] : memref<4x128xbf16, #tpu.memory_space<vmem>>, vector<4x128xbf16>
    tpu.vector_store %arg8[%c0_17, %c0_18], %25 {strides = array<i32>} : memref<4x128xbf16, #tpu.memory_space<vmem>>, vector<4x128xbf16>,
    return
  }
  func.func @transform_0(%arg0: i32) -> (i32, i32) {
    %c0_i32 = arith.constant 0 : i32
    %c0_i32_0 = arith.constant 0 : i32
    return %arg0, %c0_i32 : i32, i32
  }
  func.func @transform_1(%arg0: i32) -> (i32, i32) {
    %c0_i32 = arith.constant 0 : i32
    %c0_i32_0 = arith.constant 0 : i32
    %c0_i32_1 = arith.constant 0 : i32
    return %c0_i32, %c0_i32_0 : i32, i32
  }
  func.func @transform_2(%arg0: i32) -> (i32, i32) {
    %c0_i32 = arith.constant 0 : i32
    %c0_i32_0 = arith.constant 0 : i32
    %c0_i32_1 = arith.constant 0 : i32
    return %c0_i32, %c0_i32_0 : i32, i32
  }
  func.func @transform_3(%arg0: i32) -> (i32, i32) {
    %c0_i32 = arith.constant 0 : i32
    %c0_i32_0 = arith.constant 0 : i32
    %c0_i32_1 = arith.constant 0 : i32
    return %c0_i32, %c0_i32_0 : i32, i32
  }
  func.func @transform_4(%arg0: i32) -> (i32, i32) {
    %c0_i32 = arith.constant 0 : i32
    %c0_i32_0 = arith.constant 0 : i32
    %c0_i32_1 = arith.constant 0 : i32
    return %c0_i32, %c0_i32_0 : i32, i32
  }
  func.func @transform_5(%arg0: i32) -> (i32, i32) {
    %c0_i32 = arith.constant 0 : i32
    %c0_i32_0 = arith.constant 0 : i32
    %c0_i32_1 = arith.constant 0 : i32
    return %c0_i32, %c0_i32_0 : i32, i32
  }
  func.func @transform_6(%arg0: i32) -> (i32, i32) {
    %c0_i32 = arith.constant 0 : i32
    %c0_i32_0 = arith.constant 0 : i32
    %c0_i32_1 = arith.constant 0 : i32
    return %c0_i32, %c0_i32_0 : i32, i32
  }
  func.func @transform_7(%arg0: i32) -> (i32, i32) {
    %c0_i32 = arith.constant 0 : i32
    %c0_i32_0 = arith.constant 0 : i32
    return %arg0, %c0_i32 : i32, i32
  }
}

</mosaic_0001>

<llo_original>
// kernel: tpu_custom_call.1
$region0: #{tpu_custom_call.1}
  #allocation0 [shape = 'u32[]', space=smem, size = 0x4, offset = 0x4, fixed_abs, tag = 'smem constant byte address 0x4 - core index']
  #allocation1 [shape = 'u32[72,128]{1,0:T(1,128)}', space=vmem, size = 0x9000, scoped, tag = 'internal scratch']
  %s0 = inlined_call_operand.hbm [shape: f32[4,32], index: 0, kind: input, shape index: {}]
  %s1 = inlined_call_operand.hbm [shape: bf16[32,128], index: 1, kind: input, shape index: {}]
  %s2 = inlined_call_operand.vmem [shape: f32[1,128], index: 2, kind: input, shape index: {}]
  %s3 = inlined_call_operand.hbm [shape: bf16[128,128], index: 3, kind: input, shape index: {}]
  %s4 = inlined_call_operand.vmem [shape: f32[1,128], index: 4, kind: input, shape index: {}]
  %s5 = inlined_call_operand.hbm [shape: bf16[128,128], index: 5, kind: input, shape index: {}]
  %s6 = inlined_call_operand.vmem [shape: f32[1,128], index: 6, kind: input, shape index: {}]
  %s7 = inlined_call_operand.hbm [shape: bf16[4,128], index: 7, kind: output, shape index: {}]
  %s8 = sld [smem:[#allocation0]]
  $region54: #{tpu_custom_call.1} parent=0
    _
  %s10 = ssub.s32 1, %s8
  %s11 = scalar_select 0, %s10, %s8
  $region1: #{tpu_custom_call.1} parent=0
    #allocation2 [shape = 'u8[2048]{0}', space=vmem, size = 0x800, scoped, tag = 'input window, operand 0, single buffered']
    #allocation3 [shape = 's32[1]{0}', space=sflag, size = 0x4, scoped, tag = 'scoped memory for tpu_custom_call.1']
    #allocation4 [shape = 's32[1]{0}', space=sflag, size = 0x4, scoped, tag = 'scoped memory for tpu_custom_call.1']
    #allocation5 [shape = 'u8[8192]{0}', space=vmem, size = 0x2000, scoped, tag = 'input window, operand 1, single buffered']
    #allocation6 [shape = 's32[1]{0}', space=sflag, size = 0x4, scoped, tag = 'scoped memory for tpu_custom_call.1']
    #allocation7 [shape = 'u8[32768]{0}', space=vmem, size = 0x8000, scoped, tag = 'input window, operand 3, single buffered']
    #allocation8 [shape = 'u8[32768]{0}', space=vmem, size = 0x8000, scoped, tag = 'input window, operand 5, single buffered']
    #allocation9 [shape = 's32[1]{0}', space=sflag, size = 0x4, scoped, tag = 'scoped memory for tpu_custom_call.1']
    #allocation10 [shape = 'u8[1024]{0}', space=vmem, size = 0x400, scoped, tag = 'output window, operand 0, single buffered']
    %12 = vsyncpa [#allocation3], 0
    %13 = vsyncpa [#allocation6], 0
    %14 = vsyncpa [#allocation9], 0
    %15 = vsyncpa [#allocation4], 0
    // Predicated region
    $region2: #{tpu_custom_call.1} parent=1 // pred_check
      _
    $region3: #{tpu_custom_call.1} parent=1 // pred_check_branch
      %17 = sbr.rel (0) target = $region5
    $region4: #{tpu_custom_call.1} parent=1 // pred_region
      %19 = vsyncadd [#allocation3], 0
      %s21 = sshll.u32 %s0, 4
      %s22 = int_to_ptr.hbm [resolvable:$true] %s21
      %s23 = sshll.u32 [#allocation2], 4
      %s24 = int_to_ptr.vmem [resolvable:$true] %s23
      %26 = dma.hbm_to_vmem [thread:$0]  %s22, 64, %s24, [#allocation3]
    $region5: #{tpu_custom_call.1} parent=1 // pred_fallthru
      _
    // Predicated region
    $region6: #{tpu_custom_call.1} parent=1 // pred_check
      _
    $region7: #{tpu_custom_call.1} parent=1 // pred_check_branch
      %28 = sbr.rel (0) target = $region9
    $region8: #{tpu_custom_call.1} parent=1 // pred_region
      %30 = vsyncadd [#allocation6], 0
      %s31 = sshll.u32 %s1, 4
      %s32 = int_to_ptr.hbm [resolvable:$true] %s31
      %s33 = sshll.u32 [#allocation5], 4
      %s34 = int_to_ptr.vmem [resolvable:$true] %s33
      %39 = dma.hbm_to_vmem [thread:$0]  %s32, 256, %s34, [#allocation6], 64, 64, 4
    $region9: #{tpu_custom_call.1} parent=1 // pred_fallthru
      _
    // Predicated region
    $region10: #{tpu_custom_call.1} parent=1 // pred_check
      _
    $region11: #{tpu_custom_call.1} parent=1 // pred_check_branch
      %41 = sbr.rel (0) target = $region13
    $region12: #{tpu_custom_call.1} parent=1 // pred_region
      _
    $region13: #{tpu_custom_call.1} parent=1 // pred_fallthru
      _
    // Predicated region
    $region14: #{tpu_custom_call.1} parent=1 // pred_check
      _
    $region15: #{tpu_custom_call.1} parent=1 // pred_check_branch
      %43 = sbr.rel (0) target = $region17
    $region16: #{tpu_custom_call.1} parent=1 // pred_region
      %45 = vsyncadd [#allocation6], 0
      %s46 = sshll.u32 %s3, 4
      %s47 = int_to_ptr.hbm [resolvable:$true] %s46
      %s48 = sshll.u32 [#allocation7], 4
      %s49 = int_to_ptr.vmem [resolvable:$true] %s48
      %54 = dma.hbm_to_vmem [thread:$0]  %s47, 1024, %s49, [#allocation6], 64, 64, 4
    $region17: #{tpu_custom_call.1} parent=1 // pred_fallthru
      _
    // Predicated region
    $region18: #{tpu_custom_call.1} parent=1 // pred_check
      _
    $region19: #{tpu_custom_call.1} parent=1 // pred_check_branch
      %56 = sbr.rel (0) target = $region21
    $region20: #{tpu_custom_call.1} parent=1 // pred_region
      _
    $region21: #{tpu_custom_call.1} parent=1 // pred_fallthru
      _
    // Predicated region
    $region22: #{tpu_custom_call.1} parent=1 // pred_check
      _
    $region23: #{tpu_custom_call.1} parent=1 // pred_check_branch
      %58 = sbr.rel (0) target = $region25
    $region24: #{tpu_custom_call.1} parent=1 // pred_region
      %60 = vsyncadd [#allocation9], 0
      %s61 = sshll.u32 %s5, 4
      %s62 = int_to_ptr.hbm [resolvable:$true] %s61
      %s63 = sshll.u32 [#allocation8], 4
      %s64 = int_to_ptr.vmem [resolvable:$true] %s63
      %69 = dma.hbm_to_vmem [thread:$0]  %s62, 1024, %s64, [#allocation9], 64, 64, 4
    $region25: #{tpu_custom_call.1} parent=1 // pred_fallthru
      _
    // Predicated region
    $region26: #{tpu_custom_call.1} parent=1 // pred_check
      _
    $region27: #{tpu_custom_call.1} parent=1 // pred_check_branch
      %71 = sbr.rel (0) target = $region29
    $region28: #{tpu_custom_call.1} parent=1 // pred_region
      _
    $region29: #{tpu_custom_call.1} parent=1 // pred_fallthru
      _
    // Predicated region
    $region30: #{tpu_custom_call.1} parent=1 // pred_check
      _
    $region31: #{tpu_custom_call.1} parent=1 // pred_check_branch
      %73 = sbr.rel (0) target = $region33
    $region32: #{tpu_custom_call.1} parent=1 // pred_region
      %75 = dma.done [#allocation3], 64
    $region33: #{tpu_custom_call.1} parent=1 // pred_fallthru
      _
    // Predicated region
    $region34: #{tpu_custom_call.1} parent=1 // pred_check
      _
    $region35: #{tpu_custom_call.1} parent=1 // pred_check_branch
      %77 = sbr.rel (0) target = $region37
    $region36: #{tpu_custom_call.1} parent=1 // pred_region
      %79 = dma.done [#allocation6], 256
    $region37: #{tpu_custom_call.1} parent=1 // pred_fallthru
      _
    // Predicated region
    $region38: #{tpu_custom_call.1} parent=1 // pred_check
      _
    $region39: #{tpu_custom_call.1} parent=1 // pred_check_branch
      %81 = sbr.rel (0) target = $region41
    $region40: #{tpu_custom_call.1} parent=1 // pred_region
      %83 = dma.done [#allocation6], 1024
    $region41: #{tpu_custom_call.1} parent=1 // pred_fallthru
      _
    // Predicated region
    $region42: #{tpu_custom_call.1} parent=1 // pred_check
      _
    $region43: #{tpu_custom_call.1} parent=1 // pred_check_branch
      %85 = sbr.rel (0) target = $region45
    $region44: #{tpu_custom_call.1} parent=1 // pred_region
      %87 = dma.done [#allocation9], 1024
    $region45: #{tpu_custom_call.1} parent=1 // pred_fallthru
      _
    %v89 = vld [vmem:[#allocation2] sm:$0xf]
    %v90 = vpack.c.bf16 %v89, %v89
    %v91 = vld [vmem:[#allocation5] sm:$0xf]
    %v92 = vld [vmem:[#allocation5 + $0x4] sm:$0xf]
    %v93 = vld [vmem:[#allocation5 + $0x8] sm:$0xf]
    %v94 = vld [vmem:[#allocation5 + $0xc] sm:$0xf]
    %v95 = vld [vmem:[%s2] sm:$0x1]
    %v97 = vperm.slane %v95, 0
    %v103 = vunpack.c.l.b16 %v91
    %v104 = vunpack.c.l.b16 %v92
    %v105 = vunpack.c.l.b16 %v93
    %v106 = vunpack.c.l.b16 %v94
    %v107 = vpack.c.b16 %v104, %v103
    %v108 = vpack.c.b16 %v106, %v105
    %vm111 = vcmask 261120
    %v113 = vsel %vm111, %v90, 0
    %115 = vmatpush.bf16.msra.mxu0 0
    %116 = vmatpush.bf16.msra.mxu0 0
    %117 = vmatpush.bf16.msra.mxu0 0
    %118 = vmatpush.bf16.msra.mxu0 0
    %119 = vmatpush.bf16.msra.mxu0 0
    %120 = vmatpush.bf16.msra.mxu0 0
    %121 = vmatpush.bf16.msra.mxu0 %v108
    %122 = vmatpush.bf16.msra.mxu0 %v107
    %123 = vmatmul.bf16.gmra.mxu0 %v113
    %v124 = vpop.f32.mrf.mxu0
    %v125 = vadd.f32 %v97, %v124
    %v126 = vpop.f32.mrf.mxu0
    %127 = vdwg.mxu0
    %v128 = vmul.f32 %v125, 0.2
    %v129 = vmax.f32 %v125, %v128
    %v130 = vpack.c.bf16 %v129, %v129
    %v131 = vld [vmem:[#allocation7] sm:$0xf]
    %v132 = vld [vmem:[#allocation7 + $0x4] sm:$0xf]
    %v133 = vld [vmem:[#allocation7 + $0x8] sm:$0xf]
    %v134 = vld [vmem:[#allocation7 + $0xc] sm:$0xf]
    %v135 = vld [vmem:[#allocation7 + $0x10] sm:$0xf]
    %v136 = vld [vmem:[#allocation7 + $0x14] sm:$0xf]
    %v137 = vld [vmem:[#allocation7 + $0x18] sm:$0xf]
    %v138 = vld [vmem:[#allocation7 + $0x1c] sm:$0xf]
    %v139 = vld [vmem:[#allocation7 + $0x20] sm:$0xf]
    %v140 = vld [vmem:[#allocation7 + $0x24] sm:$0xf]
    %v141 = vld [vmem:[#allocation7 + $0x28] sm:$0xf]
    %v142 = vld [vmem:[#allocation7 + $0x2c] sm:$0xf]
    %v143 = vld [vmem:[#allocation7 + $0x30] sm:$0xf]
    %v144 = vld [vmem:[#allocation7 + $0x34] sm:$0xf]
    %v145 = vld [vmem:[#allocation7 + $0x38] sm:$0xf]
    %v146 = vld [vmem:[#allocation7 + $0x3c] sm:$0xf]
    %v147 = vld [vmem:[%s4] sm:$0x1]
    %v149 = vperm.slane %v147, 0
    %v167 = vunpack.c.l.b16 %v131
    %v168 = vunpack.c.l.b16 %v132
    %v169 = vunpack.c.l.b16 %v133
    %v170 = vunpack.c.l.b16 %v134
    %v171 = vunpack.c.l.b16 %v135
    %v172 = vunpack.c.l.b16 %v136
    %v173 = vunpack.c.l.b16 %v137
    %v174 = vunpack.c.l.b16 %v138
    %v175 = vunpack.c.l.b16 %v139
    %v176 = vunpack.c.l.b16 %v140
    %v177 = vunpack.c.l.b16 %v141
    %v178 = vunpack.c.l.b16 %v142
    %v179 = vunpack.c.l.b16 %v143
    %v180 = vunpack.c.l.b16 %v144
    %v181 = vunpack.c.l.b16 %v145
    %v182 = vunpack.c.l.b16 %v146
    %v183 = vpack.c.b16 %v168, %v167
    %v184 = vpack.c.b16 %v170, %v169
    %v185 = vpack.c.b16 %v172, %v171
    %v186 = vpack.c.b16 %v174, %v173
    %v187 = vpack.c.b16 %v176, %v175
    %v188 = vpack.c.b16 %v178, %v177
    %v189 = vpack.c.b16 %v180, %v179
    %v190 = vpack.c.b16 %v182, %v181
    %199 = vmatpush.bf16.msra.mxu0 %v190
    %200 = vmatpush.bf16.msra.mxu0 %v189
    %201 = vmatpush.bf16.msra.mxu0 %v188
    %202 = vmatpush.bf16.msra.mxu0 %v187
    %203 = vmatpush.bf16.msra.mxu0 %v186
    %204 = vmatpush.bf16.msra.mxu0 %v185
    %205 = vmatpush.bf16.msra.mxu0 %v184
    %206 = vmatpush.bf16.msra.mxu0 %v183
    %207 = vmatmul.bf16.gmra.mxu0 %v130
    %v208 = vpop.f32.mrf.mxu0
    %v209 = vadd.f32 %v149, %v208
    %v210 = vpop.f32.mrf.mxu0
    %211 = vdwg.mxu0
    %v212 = vmul.f32 %v209, 0.2
    %v213 = vmax.f32 %v209, %v212
    %v214 = vpack.c.bf16 %v213, %v213
    %v215 = vld [vmem:[#allocation8] sm:$0xf]
    %v216 = vld [vmem:[#allocation8 + $0x4] sm:$0xf]
    %v217 = vld [vmem:[#allocation8 + $0x8] sm:$0xf]
    %v218 = vld [vmem:[#allocation8 + $0xc] sm:$0xf]
    %v219 = vld [vmem:[#allocation8 + $0x10] sm:$0xf]
    %v220 = vld [vmem:[#allocation8 + $0x14] sm:$0xf]
    %v221 = vld [vmem:[#allocation8 + $0x18] sm:$0xf]
    %v222 = vld [vmem:[#allocation8 + $0x1c] sm:$0xf]
    %v223 = vld [vmem:[#allocation8 + $0x20] sm:$0xf]
    %v224 = vld [vmem:[#allocation8 + $0x24] sm:$0xf]
    %v225 = vld [vmem:[#allocation8 + $0x28] sm:$0xf]
    %v226 = vld [vmem:[#allocation8 + $0x2c] sm:$0xf]
    %v227 = vld [vmem:[#allocation8 + $0x30] sm:$0xf]
    %v228 = vld [vmem:[#allocation8 + $0x34] sm:$0xf]
    %v229 = vld [vmem:[#allocation8 + $0x38] sm:$0xf]
    %v230 = vld [vmem:[#allocation8 + $0x3c] sm:$0xf]
    %v231 = vld [vmem:[%s6] sm:$0x1]
    %v233 = vperm.slane %v231, 0
    %v251 = vunpack.c.l.b16 %v215
    %v252 = vunpack.c.l.b16 %v216
    %v253 = vunpack.c.l.b16 %v217
    %v254 = vunpack.c.l.b16 %v218
    %v255 = vunpack.c.l.b16 %v219
    %v256 = vunpack.c.l.b16 %v220
    %v257 = vunpack.c.l.b16 %v221
    %v258 = vunpack.c.l.b16 %v222
    %v259 = vunpack.c.l.b16 %v223
    %v260 = vunpack.c.l.b16 %v224
    %v261 = vunpack.c.l.b16 %v225
    %v262 = vunpack.c.l.b16 %v226
    %v263 = vunpack.c.l.b16 %v227
    %v264 = vunpack.c.l.b16 %v228
    %v265 = vunpack.c.l.b16 %v229
    %v266 = vunpack.c.l.b16 %v230
    %v267 = vpack.c.b16 %v252, %v251
    %v268 = vpack.c.b16 %v254, %v253
    %v269 = vpack.c.b16 %v256, %v255
    %v270 = vpack.c.b16 %v258, %v257
    %v271 = vpack.c.b16 %v260, %v259
    %v272 = vpack.c.b16 %v262, %v261
    %v273 = vpack.c.b16 %v264, %v263
    %v274 = vpack.c.b16 %v266, %v265
    %283 = vmatpush.bf16.msra.mxu0 %v274
    %284 = vmatpush.bf16.msra.mxu0 %v273
    %285 = vmatpush.bf16.msra.mxu0 %v272
    %286 = vmatpush.bf16.msra.mxu0 %v271
    %287 = vmatpush.bf16.msra.mxu0 %v270
    %288 = vmatpush.bf16.msra.mxu0 %v269
    %289 = vmatpush.bf16.msra.mxu0 %v268
    %290 = vmatpush.bf16.msra.mxu0 %v267
    %291 = vmatmul.bf16.gmra.mxu0 %v214
    %v292 = vpop.f32.mrf.mxu0
    %v293 = vadd.f32 %v233, %v292
    %v294 = vpop.f32.mrf.mxu0
    %295 = vdwg.mxu0
    %v296 = vpack.c.bf16 %v293, %v293
    %297 = vst [vmem:[#allocation10] sm:$0x3] %v296
    // Predicated region
    $region46: #{tpu_custom_call.1} parent=1 // pred_check
      _
    $region47: #{tpu_custom_call.1} parent=1 // pred_check_branch
      %299 = sbr.rel (0) target = $region49
    $region48: #{tpu_custom_call.1} parent=1 // pred_region
      %301 = vsyncadd [#allocation4], 0
      %s303 = sshll.u32 [#allocation10], 4
      %s304 = int_to_ptr.vmem [resolvable:$true] %s303
      %s305 = sshll.u32 %s7, 4
      %s306 = int_to_ptr.hbm [resolvable:$true] %s305
      %308 = dma.vmem_to_hbm [thread:$0]  %s304, 32, %s306, [#allocation4]
    $region49: #{tpu_custom_call.1} parent=1 // pred_fallthru
      _
    // Predicated region
    $region50: #{tpu_custom_call.1} parent=1 // pred_check
      _
    $region51: #{tpu_custom_call.1} parent=1 // pred_check_branch
      %310 = sbr.rel (0) target = $region53
    $region52: #{tpu_custom_call.1} parent=1 // pred_region
      %312 = dma.done [#allocation4], 32
    $region53: #{tpu_custom_call.1} parent=1 // pred_fallthru
      _
    %313 = vsyncpa [#allocation3], 1
    %314 = vsyncpa [#allocation6], 1
    %315 = vsyncpa [#allocation9], 1
    %316 = vsyncpa [#allocation4], 1

</llo_original>
